<compile_context>
chip_gen: v7x
topology: tpu7x:2x2x1
jax: 0.10.0
libtpu: 0.0.40
codegen_flags: <defaults>
</compile_context>

<pallas_src>
import math

import jax
import jax.numpy as jnp
from jax.experimental import pallas as pl
from jax.experimental.pallas import tpu as pltpu


def policy_mean_kernel(x_ref, w1_ref, b1_ref, w2_ref, b2_ref, w3_ref, b3_ref,
                       mean_ref):
    x = x_ref[...]
    h1 = jnp.tanh(
        jnp.dot(x, w1_ref[...], preferred_element_type=jnp.float32) + b1_ref[...]
    )
    h2 = jnp.tanh(
        jnp.dot(h1, w2_ref[...], preferred_element_type=jnp.float32) + b2_ref[...]
    )
    mean_ref[...] = (
        jnp.dot(h2, w3_ref[...], preferred_element_type=jnp.float32) + b3_ref[...]
    )


def policy_forward(x, params, *, block_b=512):
    """x: (B, num_inputs) f32.  Returns (action_mean, action_log_std, action_std),
    each (B, num_outputs) f32 — identical semantics to the torch module."""
    w1, b1, w2, b2, w3, b3, log_std = params
    B, num_inputs = x.shape
    num_outputs = w3.shape[1]
    hidden = w1.shape[1]

    # Batch tile: full batch if small (block == full dim is always legal),
    # otherwise a multiple-of-8 tile; partial last blocks are handled by Pallas.
    tb = B if B <= block_b else block_b
    grid = (pl.cdiv(B, tb),)

    const = lambda i: (0, 0)   # weights/biases resident across grid steps

    mean = pl.pallas_call(
        policy_mean_kernel,
        out_shape=jax.ShapeDtypeStruct((B, num_outputs), jnp.float32),
        grid_spec=pltpu.PrefetchScalarGridSpec(
            num_scalar_prefetch=0,
            grid=grid,
            in_specs=[
                pl.BlockSpec((tb, num_inputs), lambda i: (i, 0)),   # x tile
                pl.BlockSpec((num_inputs, hidden), const),          # W1
                pl.BlockSpec((1, hidden), const),                   # b1
                pl.BlockSpec((hidden, hidden), const),              # W2
                pl.BlockSpec((1, hidden), const),                   # b2
                pl.BlockSpec((hidden, num_outputs), const),         # W3
                pl.BlockSpec((1, num_outputs), const),              # b3
            ],
            out_specs=pl.BlockSpec((tb, num_outputs), lambda i: (i, 0)),
        ),
        compiler_params=pltpu.CompilerParams(
            dimension_semantics=("parallel",),   # v7x: shard batch tiles across 2 TCs
        ),
    )(x, w1, b1, w2, b2, w3, b3)

    # action_log_std / action_std do not depend on x: exp on (1, N) once, then broadcast.
    log_std_b = jnp.broadcast_to(log_std, mean.shape)
    std_b = jnp.broadcast_to(jnp.exp(log_std), mean.shape)
    return mean, log_std_b, std_b


def init_policy_params(key, num_inputs, num_outputs):
    """Deterministic init mimicking torch.nn.Linear defaults, including the
    post-init scaling the module applies to `action_mean`."""
    k1, k2, k3, k4, k5, k6 = jax.random.split(key, 6)

    def linear_init(kw, kb, fan_in, fan_out):
        bound = 1.0 / math.sqrt(fan_in)
        w = jax.random.uniform(kw, (fan_in, fan_out), jnp.float32, -bound, bound)
        b = jax.random.uniform(kb, (1, fan_out), jnp.float32, -bound, bound)
        return w, b

    w1, b1 = linear_init(k1, k2, num_inputs, 64)
    w2, b2 = linear_init(k3, k4, 64, 64)
    w3, b3 = linear_init(k5, k6, 64, num_outputs)
    w3 = w3 * 0.1          # action_mean.weight.data.mul_(0.1)
    b3 = b3 * 0.0          # action_mean.bias.data.mul_(0.0)
    log_std = jnp.zeros((1, num_outputs), jnp.float32)  # action_log_std param
    return (w1, b1, w2, b2, w3, b3, log_std)


def policy_forward_ref(x, params):
    w1, b1, w2, b2, w3, b3, log_std = params
    h1 = jnp.tanh(x @ w1 + b1)
    h2 = jnp.tanh(h1 @ w2 + b2)
    mean = h2 @ w3 + b3
    ls = jnp.broadcast_to(log_std, mean.shape)
    return mean, ls, jnp.exp(ls)


if __name__ == "__main__":
    key = jax.random.PRNGKey(0)
    k_x, k_x2, k_p = jax.random.split(key, 3)

    num_inputs = 16
    num_outputs = 8
    params = init_policy_params(k_p, num_inputs, num_outputs)

    # Small batch (single full-array block path)
    x = jax.random.normal(k_x, (2, num_inputs), jnp.float32)
    mean, log_std, std = policy_forward(x, params)
    jax.block_until_ready((mean, log_std, std))

    mean_r, log_std_r, std_r = policy_forward_ref(x, params)
    assert jnp.allclose(mean, mean_r, atol=1e-5, rtol=1e-5)
    assert jnp.allclose(log_std, log_std_r, atol=1e-6)
    assert jnp.allclose(std, std_r, atol=1e-6)

    # Larger batch exercising the pipelined batch grid (incl. a partial tile)
    x2 = jax.random.normal(k_x2, (400, num_inputs), jnp.float32)
    mean2, log_std2, std2 = policy_forward(x2, params, block_b=128)
    jax.block_until_ready((mean2, log_std2, std2))

    mean2_r, log_std2_r, std2_r = policy_forward_ref(x2, params)
    assert jnp.allclose(mean2, mean2_r, atol=1e-5, rtol=1e-5)
    assert jnp.allclose(log_std2, log_std2_r, atol=1e-6)
    assert jnp.allclose(std2, std2_r, atol=1e-6)

    print("KERNEL_OK")
</pallas_src>

<mosaic_0001>
module attributes {stable_mosaic.version = 11 : i64} {
  func.func @policy_mean_kernel(%arg0: i32, %arg1: memref<2x16xf32, #tpu.memory_space<vmem>>, %arg2: memref<16x64xf32, #tpu.memory_space<vmem>>, %arg3: memref<1x64xf32, #tpu.memory_space<vmem>>, %arg4: memref<64x64xf32, #tpu.memory_space<vmem>>, %arg5: memref<1x64xf32, #tpu.memory_space<vmem>>, %arg6: memref<64x8xf32, #tpu.memory_space<vmem>>, %arg7: memref<1x8xf32, #tpu.memory_space<vmem>>, %arg8: memref<2x8xf32, #tpu.memory_space<vmem>>) attributes {dimension_semantics = [#tpu.dimension_semantics<parallel>], iteration_bounds = array<i64: 1>, scalar_prefetch = 0 : i64, scratch_operands = 0 : i64, tpu.core_type = #tpu.core_type<tc>, window_params = [{transform_indices = @transform_0, window_bounds = array<i64: 2, 16>}, {pipeline_mode = #tpu.pipeline_mode<synchronous>, transform_indices = @transform_1, window_bounds = array<i64: 16, 64>}, {pipeline_mode = #tpu.pipeline_mode<synchronous>, transform_indices = @transform_2, window_bounds = array<i64: 1, 64>}, {pipeline_mode = #tpu.pipeline_mode<synchronous>, transform_indices = @transform_3, window_bounds = array<i64: 64, 64>}, {pipeline_mode = #tpu.pipeline_mode<synchronous>, transform_indices = @transform_4, window_bounds = array<i64: 1, 64>}, {pipeline_mode = #tpu.pipeline_mode<synchronous>, transform_indices = @transform_5, window_bounds = array<i64: 64, 8>}, {pipeline_mode = #tpu.pipeline_mode<synchronous>, transform_indices = @transform_6, window_bounds = array<i64: 1, 8>}, {transform_indices = @transform_7, window_bounds = array<i64: 2, 8>}]} {
    %c0 = arith.constant 0 : index
    %c0_0 = arith.constant 0 : index
    %0 = vector.load %arg1[%c0, %c0_0] : memref<2x16xf32, #tpu.memory_space<vmem>>, vector<2x16xf32>
    %c0_1 = arith.constant 0 : index
    %c0_2 = arith.constant 0 : index
    %1 = vector.load %arg2[%c0_1, %c0_2] : memref<16x64xf32, #tpu.memory_space<vmem>>, vector<16x64xf32>
    %cst = arith.constant dense<0.000000e+00> : vector<2x64xf32>
    %2 = tpu.matmul %0, %1, %cst {dimension_numbers = #tpu.dot_dimension_numbers<[1], [0], [0], [1], [0, 0, 1, 1], [], []>} : vector<2x16xf32>, vector<16x64xf32>, vector<2x64xf32> -> vector<2x64xf32>
    %c0_3 = arith.constant 0 : index
    %c0_4 = arith.constant 0 : index
    %3 = vector.load %arg3[%c0_3, %c0_4] : memref<1x64xf32, #tpu.memory_space<vmem>>, vector<1x64xf32>
    %4 = vector.broadcast %3 : vector<1x64xf32> to vector<2x64xf32>
    %5 = arith.addf %2, %4 : vector<2x64xf32>
    %6 = math.tanh %5 : vector<2x64xf32>
    %c0_5 = arith.constant 0 : index
    %c0_6 = arith.constant 0 : index
    %7 = vector.load %arg4[%c0_5, %c0_6] : memref<64x64xf32, #tpu.memory_space<vmem>>, vector<64x64xf32>
    %cst_7 = arith.constant dense<0.000000e+00> : vector<2x64xf32>
    %8 = tpu.matmul %6, %7, %cst_7 {dimension_numbers = #tpu.dot_dimension_numbers<[1], [0], [0], [1], [0, 0, 1, 1], [], []>} : vector<2x64xf32>, vector<64x64xf32>, vector<2x64xf32> -> vector<2x64xf32>
    %c0_8 = arith.constant 0 : index
    %c0_9 = arith.constant 0 : index
    %9 = vector.load %arg5[%c0_8, %c0_9] : memref<1x64xf32, #tpu.memory_space<vmem>>, vector<1x64xf32>
    %10 = vector.broadcast %9 : vector<1x64xf32> to vector<2x64xf32>
    %11 = arith.addf %8, %10 : vector<2x64xf32>
    %12 = math.tanh %11 : vector<2x64xf32>
    %c0_10 = arith.constant 0 : index
    %c0_11 = arith.constant 0 : index
    %13 = vector.load %arg6[%c0_10, %c0_11] : memref<64x8xf32, #tpu.memory_space<vmem>>, vector<64x8xf32>
    %cst_12 = arith.constant dense<0.000000e+00> : vector<2x8xf32>
    %14 = tpu.matmul %12, %13, %cst_12 {dimension_numbers = #tpu.dot_dimension_numbers<[1], [0], [0], [1], [0, 0, 1, 1], [], []>} : vector<2x64xf32>, vector<64x8xf32>, vector<2x8xf32> -> vector<2x8xf32>
    %c0_13 = arith.constant 0 : index
    %c0_14 = arith.constant 0 : index
    %15 = vector.load %arg7[%c0_13, %c0_14] : memref<1x8xf32, #tpu.memory_space<vmem>>, vector<1x8xf32>
    %16 = vector.broadcast %15 : vector<1x8xf32> to vector<2x8xf32>
    %17 = arith.addf %14, %16 : vector<2x8xf32>
    %c0_15 = arith.constant 0 : index
    %c0_16 = arith.constant 0 : index
    %18 = vector.load %arg8[%c0_15, %c0_16] : memref<2x8xf32, #tpu.memory_space<vmem>>, vector<2x8xf32>
    tpu.vector_store %arg8[%c0_15, %c0_16], %17 {strides = array<i32>} : memref<2x8xf32, #tpu.memory_space<vmem>>, vector<2x8xf32>,
    return
  }
  func.func @transform_0(%arg0: i32) -> (i32, i32) {
    %c0_i32 = arith.constant 0 : i32
    %c0_i32_0 = arith.constant 0 : i32
    return %arg0, %c0_i32 : i32, i32
  }
  func.func @transform_1(%arg0: i32) -> (i32, i32) {
    %c0_i32 = arith.constant 0 : i32
    %c0_i32_0 = arith.constant 0 : i32
    %c0_i32_1 = arith.constant 0 : i32
    return %c0_i32, %c0_i32_0 : i32, i32
  }
  func.func @transform_2(%arg0: i32) -> (i32, i32) {
    %c0_i32 = arith.constant 0 : i32
    %c0_i32_0 = arith.constant 0 : i32
    %c0_i32_1 = arith.constant 0 : i32
    return %c0_i32, %c0_i32_0 : i32, i32
  }
  func.func @transform_3(%arg0: i32) -> (i32, i32) {
    %c0_i32 = arith.constant 0 : i32
    %c0_i32_0 = arith.constant 0 : i32
    %c0_i32_1 = arith.constant 0 : i32
    return %c0_i32, %c0_i32_0 : i32, i32
  }
  func.func @transform_4(%arg0: i32) -> (i32, i32) {
    %c0_i32 = arith.constant 0 : i32
    %c0_i32_0 = arith.constant 0 : i32
    %c0_i32_1 = arith.constant 0 : i32
    return %c0_i32, %c0_i32_0 : i32, i32
  }
  func.func @transform_5(%arg0: i32) -> (i32, i32) {
    %c0_i32 = arith.constant 0 : i32
    %c0_i32_0 = arith.constant 0 : i32
    %c0_i32_1 = arith.constant 0 : i32
    return %c0_i32, %c0_i32_0 : i32, i32
  }
  func.func @transform_6(%arg0: i32) -> (i32, i32) {
    %c0_i32 = arith.constant 0 : i32
    %c0_i32_0 = arith.constant 0 : i32
    %c0_i32_1 = arith.constant 0 : i32
    return %c0_i32, %c0_i32_0 : i32, i32
  }
  func.func @transform_7(%arg0: i32) -> (i32, i32) {
    %c0_i32 = arith.constant 0 : i32
    %c0_i32_0 = arith.constant 0 : i32
    return %arg0, %c0_i32 : i32, i32
  }
}

</mosaic_0001>

<llo_original>
// kernel: tpu_custom_call.1
$region0: #{tpu_custom_call.1}
  #allocation0 [shape = 'u32[]', space=smem, size = 0x4, offset = 0x4, fixed_abs, tag = 'smem constant byte address 0x4 - core index']
  #allocation1 [shape = 'u32[144,128]{1,0:T(1,128)}', space=vmem, size = 0x12000, scoped, tag = 'internal scratch']
  %s0 = inlined_call_operand.vmem [shape: f32[2,16], index: 0, kind: input, shape index: {}]
  %s1 = inlined_call_operand.vmem [shape: f32[16,64], index: 1, kind: input, shape index: {}]
  %s2 = inlined_call_operand.hbm [shape: f32[1,64], index: 2, kind: input, shape index: {}]
  %s3 = inlined_call_operand.vmem [shape: f32[64,64], index: 3, kind: input, shape index: {}]
  %s4 = inlined_call_operand.hbm [shape: f32[1,64], index: 4, kind: input, shape index: {}]
  %s5 = inlined_call_operand.vmem [shape: f32[64,8], index: 5, kind: input, shape index: {}]
  %s6 = inlined_call_operand.vmem [shape: f32[1,8], index: 6, kind: input, shape index: {}]
  %s7 = inlined_call_operand.hbm [shape: f32[2,8], index: 7, kind: output, shape index: {}]
  %s8 = sld [smem:[#allocation0]]
  $region46: #{tpu_custom_call.1} parent=0
    _
  %s10 = ssub.s32 1, %s8
  %s11 = scalar_select 0, %s10, %s8
  $region1: #{tpu_custom_call.1} parent=0
    #allocation2 [shape = 'u8[512]{0}', space=vmem, size = 0x400, scoped, tag = 'input window, operand 2, single buffered']
    #allocation3 [shape = 's32[1]{0}', space=sflag, size = 0x4, scoped, tag = 'scoped memory for tpu_custom_call.1']
    #allocation4 [shape = 's32[1]{0}', space=sflag, size = 0x4, scoped, tag = 'scoped memory for tpu_custom_call.1']
    #allocation5 [shape = 'u8[512]{0}', space=vmem, size = 0x400, scoped, tag = 'input window, operand 4, single buffered']
    #allocation6 [shape = 's32[1]{0}', space=sflag, size = 0x4, scoped, tag = 'scoped memory for tpu_custom_call.1']
    #allocation7 [shape = 'u8[1024]{0}', space=vmem, size = 0x400, scoped, tag = 'output window, operand 0, single buffered']
    %12 = vsyncpa [#allocation3], 0
    %13 = vsyncpa [#allocation6], 0
    %14 = vsyncpa [#allocation4], 0
    // Predicated region
    $region2: #{tpu_custom_call.1} parent=1 // pred_check
      _
    $region3: #{tpu_custom_call.1} parent=1 // pred_check_branch
      %16 = sbr.rel (0) target = $region5
    $region4: #{tpu_custom_call.1} parent=1 // pred_region
      _
    $region5: #{tpu_custom_call.1} parent=1 // pred_fallthru
      _
    // Predicated region
    $region6: #{tpu_custom_call.1} parent=1 // pred_check
      _
    $region7: #{tpu_custom_call.1} parent=1 // pred_check_branch
      %18 = sbr.rel (0) target = $region9
    $region8: #{tpu_custom_call.1} parent=1 // pred_region
      _
    $region9: #{tpu_custom_call.1} parent=1 // pred_fallthru
      _
    // Predicated region
    $region10: #{tpu_custom_call.1} parent=1 // pred_check
      _
    $region11: #{tpu_custom_call.1} parent=1 // pred_check_branch
      %20 = sbr.rel (0) target = $region13
    $region12: #{tpu_custom_call.1} parent=1 // pred_region
      %s22 = ssub.s32 16, 16
      %23 = vsyncadd [#allocation3], %s22
      %s25 = sshll.u32 [#allocation2], 4
      %s26 = int_to_ptr.vmem [resolvable:$true] %s25
      %28 = dma.hbm_to_vmem [thread:$0]  %s2, 16, %s26, [#allocation3]
    $region13: #{tpu_custom_call.1} parent=1 // pred_fallthru
      _
    // Predicated region
    $region14: #{tpu_custom_call.1} parent=1 // pred_check
      _
    $region15: #{tpu_custom_call.1} parent=1 // pred_check_branch
      %30 = sbr.rel (0) target = $region17
    $region16: #{tpu_custom_call.1} parent=1 // pred_region
      _
    $region17: #{tpu_custom_call.1} parent=1 // pred_fallthru
      _
    // Predicated region
    $region18: #{tpu_custom_call.1} parent=1 // pred_check
      _
    $region19: #{tpu_custom_call.1} parent=1 // pred_check_branch
      %32 = sbr.rel (0) target = $region21
    $region20: #{tpu_custom_call.1} parent=1 // pred_region
      %s34 = ssub.s32 16, 16
      %35 = vsyncadd [#allocation6], %s34
      %s37 = sshll.u32 [#allocation5], 4
      %s38 = int_to_ptr.vmem [resolvable:$true] %s37
      %40 = dma.hbm_to_vmem [thread:$0]  %s4, 16, %s38, [#allocation6]
    $region21: #{tpu_custom_call.1} parent=1 // pred_fallthru
      _
    // Predicated region
    $region22: #{tpu_custom_call.1} parent=1 // pred_check
      _
    $region23: #{tpu_custom_call.1} parent=1 // pred_check_branch
      %42 = sbr.rel (0) target = $region25
    $region24: #{tpu_custom_call.1} parent=1 // pred_region
      _
    $region25: #{tpu_custom_call.1} parent=1 // pred_fallthru
      _
    // Predicated region
    $region26: #{tpu_custom_call.1} parent=1 // pred_check
      _
    $region27: #{tpu_custom_call.1} parent=1 // pred_check_branch
      %44 = sbr.rel (0) target = $region29
    $region28: #{tpu_custom_call.1} parent=1 // pred_region
      _
    $region29: #{tpu_custom_call.1} parent=1 // pred_fallthru
      _
    // Predicated region
    $region30: #{tpu_custom_call.1} parent=1 // pred_check
      _
    $region31: #{tpu_custom_call.1} parent=1 // pred_check_branch
      %46 = sbr.rel (0) target = $region33
    $region32: #{tpu_custom_call.1} parent=1 // pred_region
      %47 = dma.done [#allocation3], 16
    $region33: #{tpu_custom_call.1} parent=1 // pred_fallthru
      _
    // Predicated region
    $region34: #{tpu_custom_call.1} parent=1 // pred_check
      _
    $region35: #{tpu_custom_call.1} parent=1 // pred_check_branch
      %49 = sbr.rel (0) target = $region37
    $region36: #{tpu_custom_call.1} parent=1 // pred_region
      %50 = dma.done [#allocation6], 16
    $region37: #{tpu_custom_call.1} parent=1 // pred_fallthru
      _
    %v51 = vld [vmem:[%s0] sm:$0x3]
    %v52 = vld [vmem:[%s1] sm:$0xff]
    %v53 = vld [vmem:[%s1 + $0x8] sm:$0xff]
    %v54 = vld [vmem:[#allocation2] sm:$0x1]
    %v56 = vlaneseq
    %v57 = vshrl.u32 %v56, 7
    %v58 = vsub.s32 0, %v57
    %v59 = vrot.slane %v54, %v58
    %vm61 = vcmask 130048
    %v63 = vsel %vm61, %v51, 0
    %65 = vmatprep.subr.mxu0 0.0
    %66 = vmatpush1.msra.mxu0 %v52
    %67 = vmatprep.subr.mxu0 0.0
    %68 = vmatpush1.msra.mxu0 %v53
    %69 = vmatprep.subr.mxu0 0.0
    %70 = vmatpush1.msra.mxu0 0.0
    %71 = vmatprep.subr.mxu0 0.0
    %72 = vmatpush1.msra.mxu0 0.0
    %73 = vmatprep.subr.mxu0 0.0
    %74 = vmatpush1.msra.mxu0 0.0
    %75 = vmatprep.subr.mxu0 0.0
    %76 = vmatpush1.msra.mxu0 0.0
    %77 = vmatprep.subr.mxu0 0.0
    %78 = vmatpush1.msra.mxu0 0.0
    %79 = vmatprep.subr.mxu0 0.0
    %80 = vmatpush1.msra.mxu0 0.0
    %81 = vmatprep.subr.mxu0 0.0
    %82 = vmatpush1.msra.mxu0 0.0
    %83 = vmatprep.subr.mxu0 0.0
    %84 = vmatpush1.msra.mxu0 0.0
    %85 = vmatprep.subr.mxu0 0.0
    %86 = vmatpush1.msra.mxu0 0.0
    %87 = vmatprep.subr.mxu0 0.0
    %88 = vmatpush1.msra.mxu0 0.0
    %89 = vmatprep.subr.mxu0 0.0
    %90 = vmatpush1.msra.mxu0 0.0
    %91 = vmatprep.subr.mxu0 0.0
    %92 = vmatpush1.msra.mxu0 0.0
    %93 = vmatprep.subr.mxu0 0.0
    %94 = vmatpush1.msra.mxu0 0.0
    %95 = vmatprep.subr.mxu0 0.0
    %96 = vmatpush1.msra.mxu0 0.0
    %97 = vmatprep.subr.mxu0 0.0
    %98 = vmatpush1.msra.mxu0 0.0
    %99 = vmatprep.subr.mxu0 0.0
    %100 = vmatpush1.msra.mxu0 0.0
    %101 = vmatprep.subr.mxu0 0.0
    %102 = vmatpush1.msra.mxu0 0.0
    %103 = vmatprep.subr.mxu0 0.0
    %104 = vmatpush1.msra.mxu0 0.0
    %105 = vmatprep.subr.mxu0 0.0
    %106 = vmatpush1.msra.mxu0 0.0
    %107 = vmatprep.subr.mxu0 0.0
    %108 = vmatpush1.msra.mxu0 0.0
    %109 = vmatprep.subr.mxu0 0.0
    %110 = vmatpush1.msra.mxu0 0.0
    %111 = vmatprep.subr.mxu0 0.0
    %112 = vmatpush1.msra.mxu0 0.0
    %113 = vmatprep.subr.mxu0 0.0
    %114 = vmatpush1.msra.mxu0 0.0
    %115 = vmatprep.subr.mxu0 0.0
    %116 = vmatpush1.msra.mxu0 0.0
    %117 = vmatprep.subr.mxu0 0.0
    %118 = vmatpush1.msra.mxu0 0.0
    %119 = vmatprep.subr.mxu0 0.0
    %120 = vmatpush1.msra.mxu0 0.0
    %121 = vmatprep.subr.mxu0 0.0
    %122 = vmatpush1.msra.mxu0 0.0
    %123 = vmatprep.subr.mxu0 0.0
    %124 = vmatpush1.msra.mxu0 0.0
    %125 = vmatprep.subr.mxu0 0.0
    %126 = vmatpush1.msra.mxu0 0.0
    %127 = vmatprep.subr.mxu0 0.0
    %128 = vmatpush1.msra.mxu0 0.0
    %129 = vmatprep.mubr.f32.mxu0 0.0
    %130 = vmatmul.mubr.f32.gmra.mrb[0].mxu0 %v63
    %v131 = vpop.f32.mrb[0].mxu0
    %v132 = vadd.f32 %v59, %v131
    %v133 = vpop.f32.mrb[0].mxu0
    %134 = vdwg.mxu0
    %v135 = vtanh.pop %v132
    %v136 = vld [vmem:[%s3] sm:$0xff]
    %v137 = vld [vmem:[%s3 + $0x8] sm:$0xff]
    %v138 = vld [vmem:[%s3 + $0x10] sm:$0xff]
    %v139 = vld [vmem:[%s3 + $0x18] sm:$0xff]
    %v140 = vld [vmem:[%s3 + $0x20] sm:$0xff]
    %v141 = vld [vmem:[%s3 + $0x28] sm:$0xff]
    %v142 = vld [vmem:[%s3 + $0x30] sm:$0xff]
    %v143 = vld [vmem:[%s3 + $0x38] sm:$0xff]
    %v144 = vld [vmem:[#allocation5] sm:$0x1]
    %v146 = vlaneseq
    %v147 = vshrl.u32 %v146, 7
    %v148 = vsub.s32 0, %v147
    %v149 = vrot.slane %v144, %v148
    %vm151 = vcmask 523264
    %v153 = vsel %vm151, %v135, 0
    %155 = vmatprep.subr.mxu0 0.0
    %156 = vmatpush1.msra.mxu0 %v136
    %157 = vmatprep.subr.mxu0 0.0
    %158 = vmatpush1.msra.mxu0 %v137
    %159 = vmatprep.subr.mxu0 0.0
    %160 = vmatpush1.msra.mxu0 %v138
    %161 = vmatprep.subr.mxu0 0.0
    %162 = vmatpush1.msra.mxu0 %v139
    %163 = vmatprep.subr.mxu0 0.0
    %164 = vmatpush1.msra.mxu0 %v140
    %165 = vmatprep.subr.mxu0 0.0
    %166 = vmatpush1.msra.mxu0 %v141
    %167 = vmatprep.subr.mxu0 0.0
    %168 = vmatpush1.msra.mxu0 %v142
    %169 = vmatprep.subr.mxu0 0.0
    %170 = vmatpush1.msra.mxu0 %v143
    %171 = vmatprep.subr.mxu0 0.0
    %172 = vmatpush1.msra.mxu0 0.0
    %173 = vmatprep.subr.mxu0 0.0
    %174 = vmatpush1.msra.mxu0 0.0
    %175 = vmatprep.subr.mxu0 0.0
    %176 = vmatpush1.msra.mxu0 0.0
    %177 = vmatprep.subr.mxu0 0.0
    %178 = vmatpush1.msra.mxu0 0.0
    %179 = vmatprep.subr.mxu0 0.0
    %180 = vmatpush1.msra.mxu0 0.0
    %181 = vmatprep.subr.mxu0 0.0
    %182 = vmatpush1.msra.mxu0 0.0
    %183 = vmatprep.subr.mxu0 0.0
    %184 = vmatpush1.msra.mxu0 0.0
    %185 = vmatprep.subr.mxu0 0.0
    %186 = vmatpush1.msra.mxu0 0.0
    %187 = vmatprep.subr.mxu0 0.0
    %188 = vmatpush1.msra.mxu0 0.0
    %189 = vmatprep.subr.mxu0 0.0
    %190 = vmatpush1.msra.mxu0 0.0
    %191 = vmatprep.subr.mxu0 0.0
    %192 = vmatpush1.msra.mxu0 0.0
    %193 = vmatprep.subr.mxu0 0.0
    %194 = vmatpush1.msra.mxu0 0.0
    %195 = vmatprep.subr.mxu0 0.0
    %196 = vmatpush1.msra.mxu0 0.0
    %197 = vmatprep.subr.mxu0 0.0
    %198 = vmatpush1.msra.mxu0 0.0
    %199 = vmatprep.subr.mxu0 0.0
    %200 = vmatpush1.msra.mxu0 0.0
    %201 = vmatprep.subr.mxu0 0.0
    %202 = vmatpush1.msra.mxu0 0.0
    %203 = vmatprep.subr.mxu0 0.0
    %204 = vmatpush1.msra.mxu0 0.0
    %205 = vmatprep.subr.mxu0 0.0
    %206 = vmatpush1.msra.mxu0 0.0
    %207 = vmatprep.subr.mxu0 0.0
    %208 = vmatpush1.msra.mxu0 0.0
    %209 = vmatprep.subr.mxu0 0.0
    %210 = vmatpush1.msra.mxu0 0.0
    %211 = vmatprep.subr.mxu0 0.0
    %212 = vmatpush1.msra.mxu0 0.0
    %213 = vmatprep.subr.mxu0 0.0
    %214 = vmatpush1.msra.mxu0 0.0
    %215 = vmatprep.subr.mxu0 0.0
    %216 = vmatpush1.msra.mxu0 0.0
    %217 = vmatprep.subr.mxu0 0.0
    %218 = vmatpush1.msra.mxu0 0.0
    %219 = vmatprep.mubr.f32.mxu0 0.0
    %220 = vmatmul.mubr.f32.gmra.mrb[0].mxu0 %v153
    %v221 = vpop.f32.mrb[0].mxu0
    %v222 = vadd.f32 %v149, %v221
    %v223 = vpop.f32.mrb[0].mxu0
    %224 = vdwg.mxu0
    %v225 = vtanh.pop %v222
    %v226 = vld [vmem:[%s5] sm:$0xff]
    %v227 = vld [vmem:[%s5 + $0x8] sm:$0xff]
    %v228 = vld [vmem:[%s5 + $0x10] sm:$0xff]
    %v229 = vld [vmem:[%s5 + $0x18] sm:$0xff]
    %v230 = vld [vmem:[%s5 + $0x20] sm:$0xff]
    %v231 = vld [vmem:[%s5 + $0x28] sm:$0xff]
    %v232 = vld [vmem:[%s5 + $0x30] sm:$0xff]
    %v233 = vld [vmem:[%s5 + $0x38] sm:$0xff]
    %v234 = vld [vmem:[%s6] sm:$0x1]
    %v236 = vlaneseq
    %v237 = vshrl.u32 %v236, 7
    %v238 = vsub.s32 0, %v237
    %v239 = vrot.slane %v234, %v238
    %v242 = vsel %vm151, %v225, 0
    %244 = vmatprep.subr.mxu0 0.0
    %245 = vmatpush1.msra.mxu0 %v226
    %246 = vmatprep.subr.mxu0 0.0
    %247 = vmatpush1.msra.mxu0 %v227
    %248 = vmatprep.subr.mxu0 0.0
    %249 = vmatpush1.msra.mxu0 %v228
    %250 = vmatprep.subr.mxu0 0.0
    %251 = vmatpush1.msra.mxu0 %v229
    %252 = vmatprep.subr.mxu0 0.0
    %253 = vmatpush1.msra.mxu0 %v230
    %254 = vmatprep.subr.mxu0 0.0
    %255 = vmatpush1.msra.mxu0 %v231
    %256 = vmatprep.subr.mxu0 0.0
    %257 = vmatpush1.msra.mxu0 %v232
    %258 = vmatprep.subr.mxu0 0.0
    %259 = vmatpush1.msra.mxu0 %v233
    %260 = vmatprep.subr.mxu0 0.0
    %261 = vmatpush1.msra.mxu0 0.0
    %262 = vmatprep.subr.mxu0 0.0
    %263 = vmatpush1.msra.mxu0 0.0
    %264 = vmatprep.subr.mxu0 0.0
    %265 = vmatpush1.msra.mxu0 0.0
    %266 = vmatprep.subr.mxu0 0.0
    %267 = vmatpush1.msra.mxu0 0.0
    %268 = vmatprep.subr.mxu0 0.0
    %269 = vmatpush1.msra.mxu0 0.0
    %270 = vmatprep.subr.mxu0 0.0
    %271 = vmatpush1.msra.mxu0 0.0
    %272 = vmatprep.subr.mxu0 0.0
    %273 = vmatpush1.msra.mxu0 0.0
    %274 = vmatprep.subr.mxu0 0.0
    %275 = vmatpush1.msra.mxu0 0.0
    %276 = vmatprep.subr.mxu0 0.0
    %277 = vmatpush1.msra.mxu0 0.0
    %278 = vmatprep.subr.mxu0 0.0
    %279 = vmatpush1.msra.mxu0 0.0
    %280 = vmatprep.subr.mxu0 0.0
    %281 = vmatpush1.msra.mxu0 0.0
    %282 = vmatprep.subr.mxu0 0.0
    %283 = vmatpush1.msra.mxu0 0.0
    %284 = vmatprep.subr.mxu0 0.0
    %285 = vmatpush1.msra.mxu0 0.0
    %286 = vmatprep.subr.mxu0 0.0
    %287 = vmatpush1.msra.mxu0 0.0
    %288 = vmatprep.subr.mxu0 0.0
    %289 = vmatpush1.msra.mxu0 0.0
    %290 = vmatprep.subr.mxu0 0.0
    %291 = vmatpush1.msra.mxu0 0.0
    %292 = vmatprep.subr.mxu0 0.0
    %293 = vmatpush1.msra.mxu0 0.0
    %294 = vmatprep.subr.mxu0 0.0
    %295 = vmatpush1.msra.mxu0 0.0
    %296 = vmatprep.subr.mxu0 0.0
    %297 = vmatpush1.msra.mxu0 0.0
    %298 = vmatprep.subr.mxu0 0.0
    %299 = vmatpush1.msra.mxu0 0.0
    %300 = vmatprep.subr.mxu0 0.0
    %301 = vmatpush1.msra.mxu0 0.0
    %302 = vmatprep.subr.mxu0 0.0
    %303 = vmatpush1.msra.mxu0 0.0
    %304 = vmatprep.subr.mxu0 0.0
    %305 = vmatpush1.msra.mxu0 0.0
    %306 = vmatprep.subr.mxu0 0.0
    %307 = vmatpush1.msra.mxu0 0.0
    %308 = vmatprep.mubr.f32.mxu0 0.0
    %309 = vmatmul.mubr.f32.gmra.mrb[0].mxu0 %v242
    %v310 = vpop.f32.mrb[0].mxu0
    %v311 = vadd.f32 %v239, %v310
    %v312 = vpop.f32.mrb[0].mxu0
    %313 = vdwg.mxu0
    %vm314 = vcmask 58368
    %315 = vst.msk [vmem:[#allocation7] sm:$0x3] %vm314, %v311
    // Predicated region
    $region38: #{tpu_custom_call.1} parent=1 // pred_check
      _
    $region39: #{tpu_custom_call.1} parent=1 // pred_check_branch
      %317 = sbr.rel (0) target = $region41
    $region40: #{tpu_custom_call.1} parent=1 // pred_region
      %s319 = ssub.s32 32, 32
      %320 = vsyncadd [#allocation4], %s319
      %s322 = sshll.u32 [#allocation7], 4
      %s323 = int_to_ptr.vmem [resolvable:$true] %s322
      %325 = dma.vmem_to_hbm [thread:$0]  %s323, 32, %s7, [#allocation4]
    $region41: #{tpu_custom_call.1} parent=1 // pred_fallthru
      _
    // Predicated region
    $region42: #{tpu_custom_call.1} parent=1 // pred_check
      _
    $region43: #{tpu_custom_call.1} parent=1 // pred_check_branch
      %327 = sbr.rel (0) target = $region45
    $region44: #{tpu_custom_call.1} parent=1 // pred_region
      %328 = dma.done [#allocation4], 32
    $region45: #{tpu_custom_call.1} parent=1 // pred_fallthru
      _
    %329 = vsyncpa [#allocation3], 1
    %330 = vsyncpa [#allocation6], 1
    %331 = vsyncpa [#allocation4], 1

</llo_original>
